<compile_context>
chip_gen: v7x
topology: tpu7x:2x2x1
jax: 0.10.0
libtpu: 0.0.40
codegen_flags: <defaults>
</compile_context>

<pallas_src>
import math
from functools import partial

import jax
import jax.numpy as jnp
from jax.experimental import pallas as pl
from jax.experimental.pallas import tpu as pltpu


# ---------------------------------------------------------------------------
# Shared helper: channel gate from pooled sums.
#   band folds the k-tap Conv1d taps AND the 1/HW mean; sums = sum_{hw}(x1 + x2).
#   (C, C) @ (C, 1) -> (C, 1); sigmoid runs on the EUP (otherwise-idle slot).
# ---------------------------------------------------------------------------
def _gate_from_sums(band, sums):
    y = jnp.dot(band, sums, preferred_element_type=jnp.float32)   # (C, 1)
    return 1.0 / (1.0 + jnp.exp(-y))


# ---------------------------------------------------------------------------
# Fused single-pass kernel: pool + gate + 1x1 conv + folded BN + ReLU per image.
# ---------------------------------------------------------------------------
def fused_kernel(x1_ref, x2_ref, band_ref, w_ref, bias_ref, o_ref):
    # Blocks: x1/x2/o -> (1, C, HWp); band -> (C, C) f32; w -> (C, C) bf16; bias -> (C, 1).
    x2 = x2_ref[0]                                                 # (C, HWp) f32
    sums = jnp.sum(x1_ref[0] + x2, axis=-1, keepdims=True)        # (C, 1)  (pad zeros inert)
    gate = _gate_from_sums(band_ref[...], sums)                    # (C, 1)
    xs = (x2 * gate).astype(jnp.bfloat16)                          # gate-apply + MXU cast (VMEM)
    z = jnp.dot(w_ref[...], xs, preferred_element_type=jnp.float32)  # (C_out, HWp), f32 acc
    z = z + bias_ref[...]                                          # folded BN (inference)
    o_ref[0] = jnp.maximum(z, 0.0).astype(o_ref.dtype)


# ---------------------------------------------------------------------------
# Two-pass fallback, pass 1: per-channel spatial sum of (x1 + x2) over HW tiles.
# ---------------------------------------------------------------------------
def pool_kernel(x1_ref, x2_ref, sum_ref):
    # Blocks: x1/x2 -> (1, C, tHW); sum -> (1, C, 1) resident across the HW axis.
    @pl.when(pl.program_id(1) == 0)
    def _():
        sum_ref[...] = jnp.zeros_like(sum_ref)

    s = x1_ref[0] + x2_ref[0]                                      # (C, tHW) f32
    sum_ref[0] += jnp.sum(s, axis=-1, keepdims=True)               # (C, 1)


# ---------------------------------------------------------------------------
# Two-pass fallback, pass 2: in-kernel gate + 1x1 conv + folded BN + ReLU per tile.
# ---------------------------------------------------------------------------
def apply_kernel(sums_ref, x2_ref, band_ref, w_ref, bias_ref, o_ref):
    # Blocks: sums -> (1, C, 1); x2/o -> (1, C, tHW); band f32 / w bf16 -> (C, C); bias -> (C, 1).
    gate = _gate_from_sums(band_ref[...], sums_ref[0])             # tiny, hidden under DMA
    xs = (x2_ref[0] * gate).astype(jnp.bfloat16)                   # (C, tHW)
    z = jnp.dot(w_ref[...], xs, preferred_element_type=jnp.float32)
    z = z + bias_ref[...]
    o_ref[0] = jnp.maximum(z, 0.0).astype(o_ref.dtype)


# ---------------------------------------------------------------------------
# Generation-aware VMEM budgets.
# ---------------------------------------------------------------------------
def _vmem_capacity_bytes():
    try:
        info = pltpu.get_tpu_info()
        for attr in ("vmem_capacity_bytes", "vmem_bytes", "vmem_size_bytes"):
            v = getattr(info, attr, None)
            if v:
                return int(v)
    except Exception:
        pass
    return 64 * 1024 * 1024          # conservative default (v7x-class)


def _vmem_budgets():
    """Returns (per-step tile budget, scoped vmem_limit_bytes)."""
    phys = _vmem_capacity_bytes()
    if phys <= 64 * 1024 * 1024:     # v7x-class: 64 MiB physical VMEM per core
        return 12 * 1024 * 1024, 48 * 1024 * 1024
    return 16 * 1024 * 1024, 64 * 1024 * 1024   # v5e / v6e: 128 MiB physical


def _pick_hw_tile(HWp, C, budget_bytes):
    """Largest multiple-of-128 tile dividing HWp within the per-step budget.
    Per-step streaming VMEM ~ double-buffered x2 + out (f32) + bf16/f32 intermediates
    ~ 24 * C * tHW bytes."""
    max_t = max(128, (budget_bytes // (24 * C)) // 128 * 128)
    t = (min(HWp, max_t) // 128) * 128
    while HWp % t != 0:
        t -= 128
    return t


def eca_forward(x1, x2, conv1d_w, out_w, bn_gamma, bn_beta, bn_mean, bn_var,
                eps=1e-5, hw_tile=None):
    """x1, x2: (N, C, H, W) float32 (PyTorch NCHW).  Returns (N, C, H, W)."""
    N, C, H, W = x1.shape
    assert x2.shape == x1.shape
    assert C % 8 == 0, "ECA Pallas kernel assumes C % 8 == 0 (f32 sublane tiling)"
    HW = H * W

    # NCHW -> (N, C, HW): pure reshape (no transpose, no extra HBM traffic).
    x1f = x1.reshape(N, C, HW)
    x2f = x2.reshape(N, C, HW)

    # Lane-dense spatial axis: pad HW up to a multiple of 128 if needed.  Zero padding
    # does not perturb the channel sums; the padded output tail is sliced off at the end.
    HWp = ((HW + 127) // 128) * 128
    if HWp != HW:
        padw = HWp - HW
        x1f = jnp.pad(x1f, ((0, 0), (0, 0), (0, padw)))
        x2f = jnp.pad(x2f, ((0, 0), (0, 0), (0, padw)))

    tile_budget, vmem_limit = _vmem_budgets()

    # ---- Constant folds (tiny; fuse into the launch under jit) -------------
    k = conv1d_w.shape[0]
    pad = k // 2
    ci = jnp.arange(C)
    offs = ci[None, :] - ci[:, None]               # band[c, c'] nonzero iff c' == c + j - pad
    band = jnp.zeros((C, C), jnp.float32)
    for j in range(k):                              # k is 3..7, static
        band = band + jnp.where(offs == (j - pad), conv1d_w[j].astype(jnp.float32), 0.0)
    band = band / HW                                # fold the 1/HW mean into the taps

    scale_vec = (bn_gamma.astype(jnp.float32)
                 / jnp.sqrt(bn_var.astype(jnp.float32) + eps))          # (C,)
    wmat = (out_w.astype(jnp.float32) * scale_vec[:, None]).astype(jnp.bfloat16)  # BN-folded
    bias = (bn_beta.astype(jnp.float32)
            - bn_mean.astype(jnp.float32) * scale_vec).reshape(C, 1)

    # Fused-path VMEM estimate: x1 + x2 + out double-buffered f32 blocks, plus bf16/f32
    # intermediates (xs, z), plus resident band / weight / bias.
    fused_bytes = (6 * 4 + 8) * C * HWp + 12 * C * C + 4096

    if hw_tile is None and fused_bytes <= tile_budget:
        # ---- Fused single pass: grid=(N,), x2 read once ---------------------
        out = pl.pallas_call(
            fused_kernel,
            out_shape=jax.ShapeDtypeStruct((N, C, HWp), x2.dtype),
            grid=(N,),
            in_specs=[
                pl.BlockSpec((1, C, HWp), lambda n: (n, 0, 0)),   # x1
                pl.BlockSpec((1, C, HWp), lambda n: (n, 0, 0)),   # x2
                pl.BlockSpec((C, C), lambda n: (0, 0)),           # conv1d band (f32)
                pl.BlockSpec((C, C), lambda n: (0, 0)),           # BN-folded 1x1 weight (bf16)
                pl.BlockSpec((C, 1), lambda n: (0, 0)),           # BN bias
            ],
            out_specs=pl.BlockSpec((1, C, HWp), lambda n: (n, 0, 0)),
            compiler_params=pltpu.CompilerParams(
                dimension_semantics=("parallel",),
                vmem_limit_bytes=vmem_limit),
            cost_estimate=pl.CostEstimate(
                flops=2 * N * HWp * C * C + 4 * N * HWp * C,
                transcendentals=N * C,
                bytes_accessed=(3 * N * HWp * C + C * C + C) * 4 + 2 * C * C),
        )(x1f, x2f, band, wmat, bias)
    else:
        # ---- Two-pass fallback (image too large for VMEM, or tile forced) ---
        tHW = hw_tile if hw_tile is not None else _pick_hw_tile(HWp, C, tile_budget)
        assert HWp % tHW == 0, "hw_tile must divide the (padded) H*W"
        assert tHW % 128 == 0 or tHW == HWp, "hw_tile should be a multiple of 128"
        num_hw = HWp // tHW

        # Pass 1: pooled per-channel sums, accumulated over HW tiles.
        sums = pl.pallas_call(
            pool_kernel,
            out_shape=jax.ShapeDtypeStruct((N, C, 1), jnp.float32),
            grid=(N, num_hw),
            in_specs=[
                pl.BlockSpec((1, C, tHW), lambda n, h: (n, 0, h)),   # x1
                pl.BlockSpec((1, C, tHW), lambda n, h: (n, 0, h)),   # x2
            ],
            out_specs=pl.BlockSpec((1, C, 1), lambda n, h: (n, 0, 0)),
            compiler_params=pltpu.CompilerParams(
                dimension_semantics=("parallel", "arbitrary"),
                vmem_limit_bytes=vmem_limit),
            cost_estimate=pl.CostEstimate(
                flops=2 * N * HWp * C,
                transcendentals=0,
                bytes_accessed=(2 * N * HWp * C + N * C) * 4),
        )(x1f, x2f)

        # Pass 2: in-kernel gate + gate-apply + 1x1 conv + BN + ReLU per HW tile.
        out = pl.pallas_call(
            apply_kernel,
            out_shape=jax.ShapeDtypeStruct((N, C, HWp), x2.dtype),
            grid=(N, num_hw),
            in_specs=[
                pl.BlockSpec((1, C, 1), lambda n, h: (n, 0, 0)),     # pooled sums
                pl.BlockSpec((1, C, tHW), lambda n, h: (n, 0, h)),   # x2
                pl.BlockSpec((C, C), lambda n, h: (0, 0)),           # conv1d band (f32)
                pl.BlockSpec((C, C), lambda n, h: (0, 0)),           # BN-folded weight (bf16)
                pl.BlockSpec((C, 1), lambda n, h: (0, 0)),           # BN bias
            ],
            out_specs=pl.BlockSpec((1, C, tHW), lambda n, h: (n, 0, h)),
            compiler_params=pltpu.CompilerParams(
                dimension_semantics=("parallel", "parallel"),
                vmem_limit_bytes=vmem_limit),
            cost_estimate=pl.CostEstimate(
                flops=2 * N * HWp * C * C + 2 * N * HWp * C,
                transcendentals=N * num_hw * C,
                bytes_accessed=(2 * N * HWp * C + C * C + N * C + C) * 4 + 2 * C * C),
        )(sums, x2f, band, wmat, bias)

    if HWp != HW:
        out = out[:, :, :HW]
    return out.reshape(N, C, H, W)


def eca_reference(x1, x2, conv1d_w, out_w, bn_gamma, bn_beta, bn_mean, bn_var,
                  eps=1e-5):
    """Pure-JAX reference matching the PyTorch forward (eval-mode BN)."""
    N, C, H, W = x1.shape
    y = jnp.mean(x1 + x2, axis=(2, 3))               # (N, C)
    k = conv1d_w.shape[0]
    pad = k // 2
    yp = jnp.pad(y, ((0, 0), (pad, pad)))
    yc = jnp.zeros_like(y)
    for j in range(k):
        yc = yc + conv1d_w[j] * yp[:, j:j + C]
    gate = jax.nn.sigmoid(yc)[:, :, None, None]      # (N, C, 1, 1)
    xs = x2 * gate
    z = jnp.einsum('oc,nchw->nohw', out_w, xs)
    scale = bn_gamma / jnp.sqrt(bn_var + eps)
    bias = bn_beta - bn_mean * scale
    z = z * scale[None, :, None, None] + bias[None, :, None, None]
    return jnp.maximum(z, 0.0)


if __name__ == "__main__":
    N, C, H, W = 2, 32, 16, 16
    gamma, b = 2, 1

    # Kernel size exactly as in ECA.__init__.
    t = int(abs((math.log(C, 2) + b) / gamma))
    k = t if t % 2 else t + 1                        # C=32 -> k=3, pad=1

    key = jax.random.PRNGKey(0)
    k1, k2, k3, k4 = jax.random.split(key, 4)
    x1 = jax.random.normal(k1, (N, C, H, W), jnp.float32)
    x2 = jax.random.normal(k2, (N, C, H, W), jnp.float32)

    # Deterministic synthetic parameters (shapes from the module's __init__).
    conv1d_w = jax.random.normal(k3, (k,), jnp.float32) * 0.5          # Conv1d(1,1,k), no bias
    out_w = jax.random.normal(k4, (C, C), jnp.float32) / math.sqrt(C)  # Conv2d(C,C,1), no bias
    bn_gamma = jnp.ones((C,), jnp.float32)    # PyTorch BatchNorm2d defaults
    bn_beta = jnp.zeros((C,), jnp.float32)
    bn_mean = jnp.zeros((C,), jnp.float32)
    bn_var = jnp.ones((C,), jnp.float32)

    ref = eca_reference(x1, x2, conv1d_w, out_w, bn_gamma, bn_beta, bn_mean, bn_var)

    # Fused single-pass path (default at this size).
    fused_fn = jax.jit(eca_forward)
    out_fused = jax.block_until_ready(
        fused_fn(x1, x2, conv1d_w, out_w, bn_gamma, bn_beta, bn_mean, bn_var))
    assert out_fused.shape == (N, C, H, W)
    err_f = jnp.max(jnp.abs(out_fused - ref))
    # bf16 MXU operands (f32 accumulation) -> loosened tolerance vs the f32 reference.
    assert jnp.allclose(out_fused, ref, atol=2e-2, rtol=2e-2), (
        f"fused path: max abs err = {err_f}")

    # Two-pass fallback, forced via hw_tile=128 (exercises the grid-accumulation path).
    twopass_fn = jax.jit(partial(eca_forward, hw_tile=128))
    out_two = jax.block_until_ready(
        twopass_fn(x1, x2, conv1d_w, out_w, bn_gamma, bn_beta, bn_mean, bn_var))
    assert out_two.shape == (N, C, H, W)
    err_t = jnp.max(jnp.abs(out_two - ref))
    assert jnp.allclose(out_two, ref, atol=2e-2, rtol=2e-2), (
        f"two-pass path: max abs err = {err_t}")

    print("KERNEL_OK")
</pallas_src>

<mosaic_0001>
module attributes {stable_mosaic.version = 11 : i64} {
  func.func @fused_kernel(%arg0: i32, %arg1: memref<1x32x256xf32, #tpu.memory_space<vmem>>, %arg2: memref<1x32x256xf32, #tpu.memory_space<vmem>>, %arg3: memref<32x32xf32, #tpu.memory_space<vmem>>, %arg4: memref<32x32xbf16, #tpu.memory_space<vmem>>, %arg5: memref<32x1xf32, #tpu.memory_space<vmem>>, %arg6: memref<1x32x256xf32, #tpu.memory_space<vmem>>) attributes {dimension_semantics = [#tpu.dimension_semantics<parallel>], iteration_bounds = array<i64: 2>, scalar_prefetch = 0 : i64, scratch_operands = 0 : i64, tpu.core_type = #tpu.core_type<tc>, window_params = [{transform_indices = @transform_0, window_bounds = array<i64: 1, 32, 256>}, {transform_indices = @transform_1, window_bounds = array<i64: 1, 32, 256>}, {pipeline_mode = #tpu.pipeline_mode<synchronous>, transform_indices = @transform_2, window_bounds = array<i64: 32, 32>}, {pipeline_mode = #tpu.pipeline_mode<synchronous>, transform_indices = @transform_3, window_bounds = array<i64: 32, 32>}, {pipeline_mode = #tpu.pipeline_mode<synchronous>, transform_indices = @transform_4, window_bounds = array<i64: 32, 1>}, {transform_indices = @transform_5, window_bounds = array<i64: 1, 32, 256>}]} {
    %c0 = arith.constant 0 : index
    %c0_0 = arith.constant 0 : index
    %c0_1 = arith.constant 0 : index
    %0 = vector.load %arg2[%c0, %c0_0, %c0_1] : memref<1x32x256xf32, #tpu.memory_space<vmem>>, vector<1x32x256xf32>
    %1 = vector.shape_cast %0 : vector<1x32x256xf32> to vector<32x256xf32>
    %c0_2 = arith.constant 0 : index
    %c0_3 = arith.constant 0 : index
    %c0_4 = arith.constant 0 : index
    %2 = vector.load %arg1[%c0_2, %c0_3, %c0_4] : memref<1x32x256xf32, #tpu.memory_space<vmem>>, vector<1x32x256xf32>
    %3 = vector.shape_cast %2 : vector<1x32x256xf32> to vector<32x256xf32>
    %4 = arith.addf %3, %1 : vector<32x256xf32>
    %cst = arith.constant dense<0.000000e+00> : vector<32xf32>
    %5 = vector.multi_reduction <add>, %4, %cst [1] : vector<32x256xf32> to vector<32xf32>
    %6 = vector.shape_cast %5 : vector<32xf32> to vector<32x1xf32>
    %c0_5 = arith.constant 0 : index
    %c0_6 = arith.constant 0 : index
    %7 = vector.load %arg3[%c0_5, %c0_6] : memref<32x32xf32, #tpu.memory_space<vmem>>, vector<32x32xf32>
    %cst_7 = arith.constant dense<0.000000e+00> : vector<32x1xf32>
    %8 = tpu.matmul %7, %6, %cst_7 {dimension_numbers = #tpu.dot_dimension_numbers<[1], [0], [0], [1], [0, 0, 1, 1], [], []>} : vector<32x32xf32>, vector<32x1xf32>, vector<32x1xf32> -> vector<32x1xf32>
    %cst_8 = arith.constant 0.000000e+00 : f32
    %9 = vector.broadcast %cst_8 : f32 to vector<32x1xf32>
    %10 = arith.subf %9, %8 : vector<32x1xf32>
    %11 = math.exp %10 : vector<32x1xf32>
    %cst_9 = arith.constant 1.000000e+00 : f32
    %12 = vector.broadcast %cst_9 : f32 to vector<32x1xf32>
    %13 = arith.addf %12, %11 : vector<32x1xf32>
    %cst_10 = arith.constant 1.000000e+00 : f32
    %14 = vector.broadcast %cst_10 : f32 to vector<32x1xf32>
    %15 = arith.divf %14, %13 : vector<32x1xf32>
    %16 = vector.broadcast %15 : vector<32x1xf32> to vector<32x256xf32>
    %17 = arith.mulf %1, %16 : vector<32x256xf32>
    %18 = arith.truncf %17 : vector<32x256xf32> to vector<32x256xbf16>
    %c0_11 = arith.constant 0 : index
    %c0_12 = arith.constant 0 : index
    %19 = vector.load %arg4[%c0_11, %c0_12] : memref<32x32xbf16, #tpu.memory_space<vmem>>, vector<32x32xbf16>
    %cst_13 = arith.constant dense<0.000000e+00> : vector<32x256xf32>
    %20 = tpu.matmul %19, %18, %cst_13 {dimension_numbers = #tpu.dot_dimension_numbers<[1], [0], [0], [1], [0, 0, 1, 1], [], []>} : vector<32x32xbf16>, vector<32x256xbf16>, vector<32x256xf32> -> vector<32x256xf32>
    %c0_14 = arith.constant 0 : index
    %c0_15 = arith.constant 0 : index
    %21 = vector.load %arg5[%c0_14, %c0_15] : memref<32x1xf32, #tpu.memory_space<vmem>>, vector<32x1xf32>
    %22 = vector.broadcast %21 : vector<32x1xf32> to vector<32x256xf32>
    %23 = arith.addf %20, %22 : vector<32x256xf32>
    %cst_16 = arith.constant 0.000000e+00 : f32
    %24 = vector.broadcast %cst_16 : f32 to vector<32x256xf32>
    %25 = arith.maximumf %23, %24 : vector<32x256xf32>
    %c0_17 = arith.constant 0 : index
    %c0_18 = arith.constant 0 : index
    %c0_19 = arith.constant 0 : index
    %26 = vector.load %arg6[%c0_17, %c0_18, %c0_19] : memref<1x32x256xf32, #tpu.memory_space<vmem>>, vector<1x32x256xf32>
    %27 = vector.shape_cast %26 : vector<1x32x256xf32> to vector<32x256xf32>
    %28 = vector.shape_cast %25 : vector<32x256xf32> to vector<1x32x256xf32>
    tpu.vector_store %arg6[%c0_17, %c0_18, %c0_19], %28 {strides = array<i32>} : memref<1x32x256xf32, #tpu.memory_space<vmem>>, vector<1x32x256xf32>,
    return
  }
  func.func @transform_0(%arg0: i32) -> (i32, i32, i32) {
    %c0_i32 = arith.constant 0 : i32
    %c0_i32_0 = arith.constant 0 : i32
    %c0_i32_1 = arith.constant 0 : i32
    return %arg0, %c0_i32, %c0_i32_0 : i32, i32, i32
  }
  func.func @transform_1(%arg0: i32) -> (i32, i32, i32) {
    %c0_i32 = arith.constant 0 : i32
    %c0_i32_0 = arith.constant 0 : i32
    %c0_i32_1 = arith.constant 0 : i32
    return %arg0, %c0_i32, %c0_i32_0 : i32, i32, i32
  }
  func.func @transform_2(%arg0: i32) -> (i32, i32) {
    %c0_i32 = arith.constant 0 : i32
    %c0_i32_0 = arith.constant 0 : i32
    %c0_i32_1 = arith.constant 0 : i32
    return %c0_i32, %c0_i32_0 : i32, i32
  }
  func.func @transform_3(%arg0: i32) -> (i32, i32) {
    %c0_i32 = arith.constant 0 : i32
    %c0_i32_0 = arith.constant 0 : i32
    %c0_i32_1 = arith.constant 0 : i32
    return %c0_i32, %c0_i32_0 : i32, i32
  }
  func.func @transform_4(%arg0: i32) -> (i32, i32) {
    %c0_i32 = arith.constant 0 : i32
    %c0_i32_0 = arith.constant 0 : i32
    %c0_i32_1 = arith.constant 0 : i32
    return %c0_i32, %c0_i32_0 : i32, i32
  }
  func.func @transform_5(%arg0: i32) -> (i32, i32, i32) {
    %c0_i32 = arith.constant 0 : i32
    %c0_i32_0 = arith.constant 0 : i32
    %c0_i32_1 = arith.constant 0 : i32
    return %arg0, %c0_i32, %c0_i32_0 : i32, i32, i32
  }
}

</mosaic_0001>

<llo_original>
// kernel: eca_forward.1
$region0: #{eca_forward.1}
  #allocation0 [shape = 'u32[]', space=smem, size = 0x4, offset = 0x4, fixed_abs, tag = 'smem constant byte address 0x4 - core index']
  #allocation1 [shape = 'u32[144,128]{1,0:T(1,128)}', space=vmem, size = 0x12000, scoped, tag = 'internal scratch']
  %s0 = inlined_call_operand.vmem [shape: f32[2,32,256], index: 0, kind: input, shape index: {}]
  %s1 = inlined_call_operand.vmem [shape: f32[2,32,256], index: 1, kind: input, shape index: {}]
  %s2 = inlined_call_operand.vmem [shape: f32[32,32], index: 2, kind: input, shape index: {}]
  %s3 = inlined_call_operand.vmem [shape: bf16[32,32], index: 3, kind: input, shape index: {}]
  %s4 = inlined_call_operand.vmem [shape: f32[32,1], index: 4, kind: input, shape index: {}]
  %s5 = inlined_call_operand.vmem [shape: f32[2,32,256], index: 5, kind: output, shape index: {}]
  %s6 = sld [smem:[#allocation0]]
  $region53: #{eca_forward.1} parent=0
    _
  %s8 = ssub.s32 1, %s6
  %s9 = scalar_select 0, %s8, %s6
  loop: start=0, step=1, limit=4
  $region2: #{eca_forward.1} parent=0 // loop_pre_header
    _
  $region3: #{eca_forward.1} parent=0 // loop_header
    %s11 = sphi 0, %s15
    %p12 = scmp.ge.s32.totalorder %s11, 4
    %s21 = sphi 0, %s23
    %s24 = sphi 0, %s21
    %s25 = sphi 0, %s24
    %s41 = sphi 0, %s25
    %s47 = sphi 0, %s49
    %s50 = sphi 0, %s47
    %s51 = sphi 0, %s50
    %s67 = sphi 0, %s51
    %s71 = sphi 0, %s71
    %s73 = sphi 0, %s71
    %s74 = sphi 0, %s73
    %s88 = sphi 0, %s74
    %s92 = sphi 0, %s92
    %s94 = sphi 0, %s92
    %s95 = sphi 0, %s94
    %s109 = sphi 0, %s95
    %s113 = sphi 0, %s113
    %s115 = sphi 0, %s113
    %s116 = sphi 0, %s115
    %s130 = sphi 0, %s116
    %s136 = sphi 0, %s138
    %s139 = sphi 0, %s136
    %s140 = sphi 0, %s139
    %s156 = sphi 0, %s140
  $region4: #{eca_forward.1} parent=0 // loop_header_branch
    %14 = sbr.rel (%p12) target = $region8
  $region5: #{eca_forward.1} parent=0 // loop_body
    %s16 = ssub.s32 %s11, 1
    %s17 = ssub.s32 %s11, 2
    %s18 = sadd.s32 %s11, 1
    %s19 = ssub.s32 %s11, %s18
    %p20 = scmp.eq.s32.totalorder %s19, 0
    %s22 = sadd.s32 %s21, 1
    %s23 = scalar_select %p20, %s21, %s22
    %p26 = pneg %p20
    %p27 = scmp.eq.s32.totalorder %s11, 1
    %p28 = por %p26, %p27
    %p29 = scmp.ne.s32.totalorder %s21, %s24
    %p30 = scmp.eq.s32.totalorder %s11, 0
    %p31 = por %p29, %p30
    %p32 = scmp.ne.s32.totalorder %s21, %s24
    %p33 = scmp.eq.s32.totalorder %s16, 1
    %p34 = por %p32, %p33
    %p35 = scmp.ne.s32.totalorder %s24, %s25
    %p36 = scmp.eq.s32.totalorder %s16, 0
    %p37 = por %p35, %p36
    %p38 = scmp.ne.s32.totalorder %s24, %s25
    %p39 = scmp.eq.s32.totalorder %s17, 1
    %p40 = por %p38, %p39
    %p42 = scmp.ne.s32.totalorder %s25, %s41
    %p43 = scmp.eq.s32.totalorder %s17, 0
    %p44 = por %p42, %p43
    %s45 = ssub.s32 %s11, %s18
    %p46 = scmp.eq.s32.totalorder %s45, 0
    %s48 = sadd.s32 %s47, 1
    %s49 = scalar_select %p46, %s47, %s48
    %p52 = pneg %p46
    %p53 = scmp.eq.s32.totalorder %s11, 1
    %p54 = por %p52, %p53
    %p55 = scmp.ne.s32.totalorder %s47, %s50
    %p56 = scmp.eq.s32.totalorder %s11, 0
    %p57 = por %p55, %p56
    %p58 = scmp.ne.s32.totalorder %s47, %s50
    %p59 = scmp.eq.s32.totalorder %s16, 1
    %p60 = por %p58, %p59
    %p61 = scmp.ne.s32.totalorder %s50, %s51
    %p62 = scmp.eq.s32.totalorder %s16, 0
    %p63 = por %p61, %p62
    %p64 = scmp.ne.s32.totalorder %s50, %s51
    %p65 = scmp.eq.s32.totalorder %s17, 1
    %p66 = por %p64, %p65
    %p68 = scmp.ne.s32.totalorder %s51, %s67
    %p69 = scmp.eq.s32.totalorder %s17, 0
    %p70 = por %p68, %p69
    %s72 = sadd.s32 %s71, 1
    %p75 = scmp.eq.s32.totalorder %s11, 1
    %p76 = scmp.ne.s32.totalorder %s71, %s73
    %p77 = scmp.eq.s32.totalorder %s11, 0
    %p78 = por %p76, %p77
    %p79 = scmp.ne.s32.totalorder %s71, %s73
    %p80 = scmp.eq.s32.totalorder %s16, 1
    %p81 = por %p79, %p80
    %p82 = scmp.ne.s32.totalorder %s73, %s74
    %p83 = scmp.eq.s32.totalorder %s16, 0
    %p84 = por %p82, %p83
    %p85 = scmp.ne.s32.totalorder %s73, %s74
    %p86 = scmp.eq.s32.totalorder %s17, 1
    %p87 = por %p85, %p86
    %p89 = scmp.ne.s32.totalorder %s74, %s88
    %p90 = scmp.eq.s32.totalorder %s17, 0
    %p91 = por %p89, %p90
    %s93 = sadd.s32 %s92, 1
    %p96 = scmp.eq.s32.totalorder %s11, 1
    %p97 = scmp.ne.s32.totalorder %s92, %s94
    %p98 = scmp.eq.s32.totalorder %s11, 0
    %p99 = por %p97, %p98
    %p100 = scmp.ne.s32.totalorder %s92, %s94
    %p101 = scmp.eq.s32.totalorder %s16, 1
    %p102 = por %p100, %p101
    %p103 = scmp.ne.s32.totalorder %s94, %s95
    %p104 = scmp.eq.s32.totalorder %s16, 0
    %p105 = por %p103, %p104
    %p106 = scmp.ne.s32.totalorder %s94, %s95
    %p107 = scmp.eq.s32.totalorder %s17, 1
    %p108 = por %p106, %p107
    %p110 = scmp.ne.s32.totalorder %s95, %s109
    %p111 = scmp.eq.s32.totalorder %s17, 0
    %p112 = por %p110, %p111
    %s114 = sadd.s32 %s113, 1
    %p117 = scmp.eq.s32.totalorder %s11, 1
    %p118 = scmp.ne.s32.totalorder %s113, %s115
    %p119 = scmp.eq.s32.totalorder %s11, 0
    %p120 = por %p118, %p119
    %p121 = scmp.ne.s32.totalorder %s113, %s115
    %p122 = scmp.eq.s32.totalorder %s16, 1
    %p123 = por %p121, %p122
    %p124 = scmp.ne.s32.totalorder %s115, %s116
    %p125 = scmp.eq.s32.totalorder %s16, 0
    %p126 = por %p124, %p125
    %p127 = scmp.ne.s32.totalorder %s115, %s116
    %p128 = scmp.eq.s32.totalorder %s17, 1
    %p129 = por %p127, %p128
    %p131 = scmp.ne.s32.totalorder %s116, %s130
    %p132 = scmp.eq.s32.totalorder %s17, 0
    %p133 = por %p131, %p132
    %s134 = ssub.s32 %s11, %s18
    %p135 = scmp.eq.s32.totalorder %s134, 0
    %s137 = sadd.s32 %s136, 1
    %s138 = scalar_select %p135, %s136, %s137
    %p141 = pneg %p135
    %p142 = scmp.eq.s32.totalorder %s11, 1
    %p143 = por %p141, %p142
    %p144 = scmp.ne.s32.totalorder %s136, %s139
    %p145 = scmp.eq.s32.totalorder %s11, 0
    %p146 = por %p144, %p145
    %p147 = scmp.ne.s32.totalorder %s136, %s139
    %p148 = scmp.eq.s32.totalorder %s16, 1
    %p149 = por %p147, %p148
    %p150 = scmp.ne.s32.totalorder %s139, %s140
    %p151 = scmp.eq.s32.totalorder %s16, 0
    %p152 = por %p150, %p151
    %p153 = scmp.ne.s32.totalorder %s139, %s140
    %p154 = scmp.eq.s32.totalorder %s17, 1
    %p155 = por %p153, %p154
    %p157 = scmp.ne.s32.totalorder %s140, %s156
    %p158 = scmp.eq.s32.totalorder %s17, 0
    %p159 = por %p157, %p158
    %p160 = scmp.le.s32.totalorder 1, %s11
    %p161 = scmp.lt.s32.totalorder %s11, 3
    %p162 = pnand %p160, %p161
    %p163 = pneg %p162
    // Predicated region
    $region9: #{eca_forward.1} parent=5 // pred_check
      _
    $region10: #{eca_forward.1} parent=5 // pred_check_branch
      %165 = sbr.rel (%p162) target = $region12
    $region11: #{eca_forward.1} parent=5 // pred_region
      %s166 = ssub.s32 %s11, 1
      // Predicated region
      $region13: #{eca_forward.1} parent=11 // pred_check
        %p167 = pneg %p84
      $region14: #{eca_forward.1} parent=11 // pred_check_branch
        %169 = sbr.rel (%p167) target = $region16
      $region15: #{eca_forward.1} parent=11 // pred_region
        _
      $region16: #{eca_forward.1} parent=11 // pred_fallthru
        _
      // Predicated region
      $region17: #{eca_forward.1} parent=11 // pred_check
        %p170 = pneg %p105
      $region18: #{eca_forward.1} parent=11 // pred_check_branch
        %172 = sbr.rel (%p170) target = $region20
      $region19: #{eca_forward.1} parent=11 // pred_region
        _
      $region20: #{eca_forward.1} parent=11 // pred_fallthru
        _
      // Predicated region
      $region21: #{eca_forward.1} parent=11 // pred_check
        %p173 = pneg %p126
      $region22: #{eca_forward.1} parent=11 // pred_check_branch
        %175 = sbr.rel (%p173) target = $region24
      $region23: #{eca_forward.1} parent=11 // pred_region
        _
      $region24: #{eca_forward.1} parent=11 // pred_fallthru
        _
    $region12: #{eca_forward.1} parent=5 // pred_fallthru
      _
    %p176 = scmp.lt.s32.totalorder %s11, 2
    // Predicated region
    $region25: #{eca_forward.1} parent=5 // pred_check
      %p177 = pneg %p176
    $region26: #{eca_forward.1} parent=5 // pred_check_branch
      %179 = sbr.rel (%p177) target = $region28
    $region27: #{eca_forward.1} parent=5 // pred_region
      // Predicated region
      $region29: #{eca_forward.1} parent=27 // pred_check
        %p180 = pneg %p31
      $region30: #{eca_forward.1} parent=27 // pred_check_branch
        %182 = sbr.rel (%p180) target = $region32
      $region31: #{eca_forward.1} parent=27 // pred_region
        %p183 = scmp.lt.s32.totalorder %s11, 1
        %s184 = scalar_select %p183, %s11, 1
        %s185 = smul.addr %s184, 8
        %s186 = smul.addr %s185, 8
        %s187 = scalar_lea.vmem %s0, %s186
      $region32: #{eca_forward.1} parent=27 // pred_fallthru
        _
      // Predicated region
      $region33: #{eca_forward.1} parent=27 // pred_check
        %p188 = pneg %p57
      $region34: #{eca_forward.1} parent=27 // pred_check_branch
        %190 = sbr.rel (%p188) target = $region36
      $region35: #{eca_forward.1} parent=27 // pred_region
        %p191 = scmp.lt.s32.totalorder %s11, 1
        %s192 = scalar_select %p191, %s11, 1
        %s193 = smul.addr %s192, 8
        %s194 = smul.addr %s193, 8
        %s195 = scalar_lea.vmem %s1, %s194
      $region36: #{eca_forward.1} parent=27 // pred_fallthru
        _
    $region28: #{eca_forward.1} parent=5 // pred_fallthru
      _
    %p196 = scmp.le.s32.totalorder 1, %s11
    %p197 = scmp.lt.s32.totalorder %s11, 3
    %p198 = pnand %p196, %p197
    %p199 = pneg %p198
    // Predicated region
    $region37: #{eca_forward.1} parent=5 // pred_check
      _
    $region38: #{eca_forward.1} parent=5 // pred_check_branch
      %201 = sbr.rel (%p198) target = $region40
    $region39: #{eca_forward.1} parent=5 // pred_region
      %s202 = ssub.s32 %s11, 1
      %p203 = scmp.lt.s32.totalorder %s16, 1
      %s204 = scalar_select %p203, %s16, 1
      %s205 = smul.addr %s204, 8
      %s206 = smul.addr %s205, 8
      %s207 = scalar_lea.vmem %s0, %s206
      %p208 = pneg %p37
      %p209 = pneg %p34
      %p210 = scmp.lt.s32.totalorder %s16, 1
      %s211 = scalar_select %p210, %s16, 1
      %s212 = smul.addr %s211, 8
      %s213 = smul.addr %s212, 8
      %s214 = scalar_lea.vmem %s1, %s213
      %p215 = pneg %p63
      %p216 = pneg %p60
      %p217 = pneg %p84
      %p218 = pneg %p81
      %p219 = pneg %p105
      %p220 = pneg %p102
      %p221 = pneg %p126
      %p222 = pneg %p123
      %p223 = pneg %p152
      %p224 = pneg %p149
      %p225 = scmp.lt.s32.totalorder %s16, 1
      %s226 = scalar_select %p225, %s16, 1
      %s227 = smul.addr %s226, 8
      %s228 = smul.addr %s227, 8
      %s229 = scalar_lea.vmem %s5, %s228
      %p230 = scmp.lt.s32.totalorder %s16, 1
      %s231 = scalar_select %p230, %s16, 1
      %s232 = smul.addr %s231, 8
      %s233 = smul.addr %s232, 8
      %s234 = scalar_lea.vmem %s0, %s233
      %p235 = scmp.lt.s32.totalorder %s16, 1
      %s236 = scalar_select %p235, %s16, 1
      %s237 = smul.addr %s236, 8
      %s238 = smul.addr %s237, 8
      %s239 = scalar_lea.vmem %s1, %s238
      %p240 = scmp.lt.s32.totalorder %s16, 1
      %s241 = scalar_select %p240, %s16, 1
      %s242 = smul.addr %s241, 8
      %s243 = smul.addr %s242, 8
      %s244 = scalar_lea.vmem %s5, %s243
      %v246 = vld [vmem:[%s239] sm:$0xff]
      %v247 = vld [vmem:[%s239 + $0x8] sm:$0xff]
      %v248 = vld [vmem:[%s239 + $0x10] sm:$0xff]
      %v249 = vld [vmem:[%s239 + $0x18] sm:$0xff]
      %v250 = vld [vmem:[%s239 + $0x20] sm:$0xff]
      %v251 = vld [vmem:[%s239 + $0x28] sm:$0xff]
      %v252 = vld [vmem:[%s239 + $0x30] sm:$0xff]
      %v253 = vld [vmem:[%s239 + $0x38] sm:$0xff]
      %v254 = vld [vmem:[%s234] sm:$0xff]
      %v255 = vld [vmem:[%s234 + $0x8] sm:$0xff]
      %v256 = vld [vmem:[%s234 + $0x10] sm:$0xff]
      %v257 = vld [vmem:[%s234 + $0x18] sm:$0xff]
      %v258 = vld [vmem:[%s234 + $0x20] sm:$0xff]
      %v259 = vld [vmem:[%s234 + $0x28] sm:$0xff]
      %v260 = vld [vmem:[%s234 + $0x30] sm:$0xff]
      %v261 = vld [vmem:[%s234 + $0x38] sm:$0xff]
      %v262 = vadd.f32 %v254, %v246
      %v263 = vadd.f32 %v255, %v247
      %v264 = vadd.f32 %v256, %v248
      %v265 = vadd.f32 %v257, %v249
      %v266 = vadd.f32 %v258, %v250
      %v267 = vadd.f32 %v259, %v251
      %v268 = vadd.f32 %v260, %v252
      %v269 = vadd.f32 %v261, %v253
      %v270 = vadd.f32 %v262, %v263
      %271 = vadd.xlane.f32.xlu0 %v270
      %v272 = vpop.xlane.xlu0 %271
      %v273 = vadd.f32 %v264, %v265
      %274 = vadd.xlane.f32.xlu0 %v273
      %v275 = vpop.xlane.xlu0 %274
      %v276 = vadd.f32 %v266, %v267
      %277 = vadd.xlane.f32.xlu0 %v276
      %v278 = vpop.xlane.xlu0 %277
      %v279 = vadd.f32 %v268, %v269
      %280 = vadd.xlane.f32.xlu0 %v279
      %v281 = vpop.xlane.xlu0 %280
      %v282 = vld [vmem:[%s2] sm:$0xff]
      %v283 = vld [vmem:[%s2 + $0x8] sm:$0xff]
      %v284 = vld [vmem:[%s2 + $0x10] sm:$0xff]
      %v285 = vld [vmem:[%s2 + $0x18] sm:$0xff]
      %vm286 = vcmask 261120
      %v288 = vsel %vm286, %v282, 0
      %v291 = vsel %vm286, %v283, 0
      %v294 = vsel %vm286, %v284, 0
      %v297 = vsel %vm286, %v285, 0
      %299 = vmatprep.subr.mxu0 0.0
      %300 = vmatpush1.msra.mxu0 %v272
      %301 = vmatprep.subr.mxu0 0.0
      %302 = vmatpush1.msra.mxu0 %v275
      %303 = vmatprep.subr.mxu0 0.0
      %304 = vmatpush1.msra.mxu0 %v278
      %305 = vmatprep.subr.mxu0 0.0
      %306 = vmatpush1.msra.mxu0 %v281
      %307 = vmatprep.subr.mxu0 0.0
      %308 = vmatpush1.msra.mxu0 0.0
      %309 = vmatprep.subr.mxu0 0.0
      %310 = vmatpush1.msra.mxu0 0.0
      %311 = vmatprep.subr.mxu0 0.0
      %312 = vmatpush1.msra.mxu0 0.0
      %313 = vmatprep.subr.mxu0 0.0
      %314 = vmatpush1.msra.mxu0 0.0
      %315 = vmatprep.subr.mxu0 0.0
      %316 = vmatpush1.msra.mxu0 0.0
      %317 = vmatprep.subr.mxu0 0.0
      %318 = vmatpush1.msra.mxu0 0.0
      %319 = vmatprep.subr.mxu0 0.0
      %320 = vmatpush1.msra.mxu0 0.0
      %321 = vmatprep.subr.mxu0 0.0
      %322 = vmatpush1.msra.mxu0 0.0
      %323 = vmatprep.subr.mxu0 0.0
      %324 = vmatpush1.msra.mxu0 0.0
      %325 = vmatprep.subr.mxu0 0.0
      %326 = vmatpush1.msra.mxu0 0.0
      %327 = vmatprep.subr.mxu0 0.0
      %328 = vmatpush1.msra.mxu0 0.0
      %329 = vmatprep.subr.mxu0 0.0
      %330 = vmatpush1.msra.mxu0 0.0
      %331 = vmatprep.subr.mxu0 0.0
      %332 = vmatpush1.msra.mxu0 0.0
      %333 = vmatprep.subr.mxu0 0.0
      %334 = vmatpush1.msra.mxu0 0.0
      %335 = vmatprep.subr.mxu0 0.0
      %336 = vmatpush1.msra.mxu0 0.0
      %337 = vmatprep.subr.mxu0 0.0
      %338 = vmatpush1.msra.mxu0 0.0
      %339 = vmatprep.subr.mxu0 0.0
      %340 = vmatpush1.msra.mxu0 0.0
      %341 = vmatprep.subr.mxu0 0.0
      %342 = vmatpush1.msra.mxu0 0.0
      %343 = vmatprep.subr.mxu0 0.0
      %344 = vmatpush1.msra.mxu0 0.0
      %345 = vmatprep.subr.mxu0 0.0
      %346 = vmatpush1.msra.mxu0 0.0
      %347 = vmatprep.subr.mxu0 0.0
      %348 = vmatpush1.msra.mxu0 0.0
      %349 = vmatprep.subr.mxu0 0.0
      %350 = vmatpush1.msra.mxu0 0.0
      %351 = vmatprep.subr.mxu0 0.0
      %352 = vmatpush1.msra.mxu0 0.0
      %353 = vmatprep.subr.mxu0 0.0
      %354 = vmatpush1.msra.mxu0 0.0
      %355 = vmatprep.subr.mxu0 0.0
      %356 = vmatpush1.msra.mxu0 0.0
      %357 = vmatprep.subr.mxu0 0.0
      %358 = vmatpush1.msra.mxu0 0.0
      %359 = vmatprep.subr.mxu0 0.0
      %360 = vmatpush1.msra.mxu0 0.0
      %361 = vmatprep.subr.mxu0 0.0
      %362 = vmatpush1.msra.mxu0 0.0
      %363 = vmatprep.mubr.f32.mxu0 0.0
      %364 = vmatmul.mubr.f32.gmra.mrb[0].mxu0 %v288
      %v365 = vpop.f32.mrb[0].mxu0
      %v366 = vadd.f32 0.0, %v365
      %v367 = vpop.f32.mrb[0].mxu0
      %368 = vmatprep.mubr.f32.mxu0 0.0
      %369 = vmatmul.mubr.f32.gmra.mrb[0].mxu0 %v291
      %v370 = vpop.f32.mrb[0].mxu0
      %v371 = vadd.f32 0.0, %v370
      %v372 = vpop.f32.mrb[0].mxu0
      %373 = vmatprep.mubr.f32.mxu0 0.0
      %374 = vmatmul.mubr.f32.gmra.mrb[0].mxu0 %v294
      %v375 = vpop.f32.mrb[0].mxu0
      %v376 = vadd.f32 0.0, %v375
      %v377 = vpop.f32.mrb[0].mxu0
      %378 = vmatprep.mubr.f32.mxu0 0.0
      %379 = vmatmul.mubr.f32.gmra.mrb[0].mxu0 %v297
      %v380 = vpop.f32.mrb[0].mxu0
      %v381 = vadd.f32 0.0, %v380
      %v382 = vpop.f32.mrb[0].mxu0
      %383 = vdwg.mxu0
      %v384 = vsub.f32 0.0, %v366
      %v385 = vsub.f32 0.0, %v371
      %v386 = vsub.f32 0.0, %v376
      %v387 = vsub.f32 0.0, %v381
      %v388 = vmul.f32 %v384, 1.442695
      %v389 = vpow.pop %v388
      %v390 = vmul.f32 %v385, 1.442695
      %v391 = vpow.pop %v390
      %v392 = vmul.f32 %v386, 1.442695
      %v393 = vpow.pop %v392
      %v394 = vmul.f32 %v387, 1.442695
      %v395 = vpow.pop %v394
      %v396 = vadd.f32 %v389, 1.0
      %v397 = vadd.f32 %v391, 1.0
      %v398 = vadd.f32 %v393, 1.0
      %v399 = vadd.f32 %v395, 1.0
      %v400 = vrcp.pop %v396
      %v401 = vmul.f32 1.0, %v400
      %v402 = vrcp.pop %v397
      %v403 = vmul.f32 1.0, %v402
      %v404 = vrcp.pop %v398
      %v405 = vmul.f32 1.0, %v404
      %v406 = vrcp.pop %v399
      %v407 = vmul.f32 1.0, %v406
      %409 = vset.pattern.permute.xlu0 0
      %410 = vperm.xlu0 %409, %v401
      %v411 = vpop.permute.xlu0 %410
      %414 = vset.pattern.permute.xlu0 0
      %415 = vperm.xlu0 %414, %v403
      %v416 = vpop.permute.xlu0 %415
      %419 = vset.pattern.permute.xlu0 0
      %420 = vperm.xlu0 %419, %v405
      %v421 = vpop.permute.xlu0 %420
      %424 = vset.pattern.permute.xlu0 0
      %425 = vperm.xlu0 %424, %v407
      %v426 = vpop.permute.xlu0 %425
      %v428 = vmul.f32 %v246, %v411
      %v429 = vmul.f32 %v247, %v411
      %v430 = vmul.f32 %v248, %v416
      %v431 = vmul.f32 %v249, %v416
      %v432 = vmul.f32 %v250, %v421
      %v433 = vmul.f32 %v251, %v421
      %v434 = vmul.f32 %v252, %v426
      %v435 = vmul.f32 %v253, %v426
      %v436 = vpack.c.bf16 %v430, %v428
      %v437 = vpack.c.bf16 %v431, %v429
      %v438 = vpack.c.bf16 %v434, %v432
      %v439 = vpack.c.bf16 %v435, %v433
      %v440 = vld [vmem:[%s3] sm:$0xf]
      %v441 = vld [vmem:[%s3 + $0x4] sm:$0xf]
      %v442 = vld [vmem:[%s3 + $0x8] sm:$0xf]
      %v443 = vld [vmem:[%s3 + $0xc] sm:$0xf]
      %v444 = vld [vmem:[%s4] sm:$0xff]
      %v445 = vld [vmem:[%s4 + $0x8] sm:$0xff]
      %v446 = vld [vmem:[%s4 + $0x10] sm:$0xff]
      %v447 = vld [vmem:[%s4 + $0x18] sm:$0xff]
      %449 = vset.pattern.permute.xlu0 0
      %450 = vperm.xlu0 %449, %v444
      %v451 = vpop.permute.xlu0 %450
      %454 = vset.pattern.permute.xlu0 0
      %455 = vperm.xlu0 %454, %v445
      %v456 = vpop.permute.xlu0 %455
      %459 = vset.pattern.permute.xlu0 0
      %460 = vperm.xlu0 %459, %v446
      %v461 = vpop.permute.xlu0 %460
      %464 = vset.pattern.permute.xlu0 0
      %465 = vperm.xlu0 %464, %v447
      %v466 = vpop.permute.xlu0 %465
      %v472 = vunpack.c.l.b16 %v440
      %v473 = vunpack.c.l.b16 %v441
      %v474 = vunpack.c.l.b16 %v442
      %v475 = vunpack.c.l.b16 %v443
      %v476 = vpack.c.b16 %v473, %v472
      %v477 = vpack.c.b16 %v475, %v474
      %v479 = vsel %vm286, %v476, 0
      %v482 = vsel %vm286, %v477, 0
      %484 = vmatprep.subr.bf16.mxu0 %v437
      %485 = vmatpush1.bf16.msra.mxu0 %v436
      %486 = vmatprep.subr.bf16.mxu0 %v439
      %487 = vmatpush1.bf16.msra.mxu0 %v438
      %488 = vmatprep.subr.bf16.mxu0 0
      %489 = vmatpush1.bf16.msra.mxu0 0
      %490 = vmatprep.subr.bf16.mxu0 0
      %491 = vmatpush1.bf16.msra.mxu0 0
      %492 = vmatprep.subr.bf16.mxu0 0
      %493 = vmatpush1.bf16.msra.mxu0 0
      %494 = vmatprep.subr.bf16.mxu0 0
      %495 = vmatpush1.bf16.msra.mxu0 0
      %496 = vmatprep.subr.bf16.mxu0 0
      %497 = vmatpush1.bf16.msra.mxu0 0
      %498 = vmatprep.subr.bf16.mxu0 0
      %499 = vmatpush1.bf16.msra.mxu0 0
      %500 = vmatprep.subr.bf16.mxu0 0
      %501 = vmatpush1.bf16.msra.mxu0 0
      %502 = vmatprep.subr.bf16.mxu0 0
      %503 = vmatpush1.bf16.msra.mxu0 0
      %504 = vmatprep.subr.bf16.mxu0 0
      %505 = vmatpush1.bf16.msra.mxu0 0
      %506 = vmatprep.subr.bf16.mxu0 0
      %507 = vmatpush1.bf16.msra.mxu0 0
      %508 = vmatprep.subr.bf16.mxu0 0
      %509 = vmatpush1.bf16.msra.mxu0 0
      %510 = vmatprep.subr.bf16.mxu0 0
      %511 = vmatpush1.bf16.msra.mxu0 0
      %512 = vmatprep.subr.bf16.mxu0 0
      %513 = vmatpush1.bf16.msra.mxu0 0
      %514 = vmatprep.subr.bf16.mxu0 0
      %515 = vmatpush1.bf16.msra.mxu0 0
      %516 = vmatprep.mubr.bf16.mxu0 0
      %517 = vmatmul.mubr.bf16.gmra.mrb[0].mxu0 %v479
      %v518 = vpop.f32.mrb[0].mxu0
      %v519 = vadd.f32 %v451, %v518
      %v520 = vpop.f32.mrb[0].mxu0
      %v521 = vadd.f32 %v451, %v520
      %v522 = vpop.f32.mrb[0].mxu0
      %v523 = vadd.f32 %v456, %v522
      %v524 = vpop.f32.mrb[0].mxu0
      %v525 = vadd.f32 %v456, %v524
      %526 = vmatprep.mubr.bf16.mxu0 0
      %527 = vmatmul.mubr.bf16.gmra.mrb[0].mxu0 %v482
      %v528 = vpop.f32.mrb[0].mxu0
      %v529 = vadd.f32 %v461, %v528
      %v530 = vpop.f32.mrb[0].mxu0
      %v531 = vadd.f32 %v461, %v530
      %v532 = vpop.f32.mrb[0].mxu0
      %v533 = vadd.f32 %v466, %v532
      %v534 = vpop.f32.mrb[0].mxu0
      %v535 = vadd.f32 %v466, %v534
      %536 = vdwg.mxu0
      %v537 = vmax.f32 %v519, 0.0
      %v538 = vmax.f32 %v521, 0.0
      %v539 = vmax.f32 %v523, 0.0
      %v540 = vmax.f32 %v525, 0.0
      %v541 = vmax.f32 %v529, 0.0
      %v542 = vmax.f32 %v531, 0.0
      %v543 = vmax.f32 %v533, 0.0
      %v544 = vmax.f32 %v535, 0.0
      %545 = vst [vmem:[%s244] sm:$0xff] %v537
      %546 = vst [vmem:[%s244 + $0x8] sm:$0xff] %v538
      %547 = vst [vmem:[%s244 + $0x10] sm:$0xff] %v539
      %548 = vst [vmem:[%s244 + $0x18] sm:$0xff] %v540
      %549 = vst [vmem:[%s244 + $0x20] sm:$0xff] %v541
      %550 = vst [vmem:[%s244 + $0x28] sm:$0xff] %v542
      %551 = vst [vmem:[%s244 + $0x30] sm:$0xff] %v543
      %552 = vst [vmem:[%s244 + $0x38] sm:$0xff] %v544
      %p553 = scmp.lt.s32.totalorder %s16, 1
      %s554 = scalar_select %p553, %s16, 1
      %s555 = smul.addr %s554, 8
      %s556 = smul.addr %s555, 8
      %s557 = scalar_lea.vmem %s5, %s556
      // Predicated region
      $region41: #{eca_forward.1} parent=39 // pred_check
        %p558 = pneg %p149
      $region42: #{eca_forward.1} parent=39 // pred_check_branch
        %560 = sbr.rel (%p558) target = $region44
      $region43: #{eca_forward.1} parent=39 // pred_region
        _
      $region44: #{eca_forward.1} parent=39 // pred_fallthru
        _
    $region40: #{eca_forward.1} parent=5 // pred_fallthru
      _
    %p561 = scmp.le.s32.totalorder 2, %s11
    // Predicated region
    $region45: #{eca_forward.1} parent=5 // pred_check
      %p562 = pneg %p561
    $region46: #{eca_forward.1} parent=5 // pred_check_branch
      %564 = sbr.rel (%p562) target = $region48
    $region47: #{eca_forward.1} parent=5 // pred_region
      %s565 = ssub.s32 %s11, 2
      // Predicated region
      $region49: #{eca_forward.1} parent=47 // pred_check
        %p566 = pneg %p155
      $region50: #{eca_forward.1} parent=47 // pred_check_branch
        %568 = sbr.rel (%p566) target = $region52
      $region51: #{eca_forward.1} parent=47 // pred_region
        %p569 = scmp.lt.s32.totalorder %s17, 1
        %s570 = scalar_select %p569, %s17, 1
        %s571 = smul.addr %s570, 8
        %s572 = smul.addr %s571, 8
        %s573 = scalar_lea.vmem %s5, %s572
      $region52: #{eca_forward.1} parent=47 // pred_fallthru
        _
    $region48: #{eca_forward.1} parent=5 // pred_fallthru
      _
  $region6: #{eca_forward.1} parent=0 // loop_footer
    %s15 = sadd.s32 1, %s11
  $region7: #{eca_forward.1} parent=0 // loop_footer_branch
    %10 = sbr.rel target = $region3
  $region8: #{eca_forward.1} parent=0 // loop_exit
    _

</llo_original>
